<compile_context>
chip_gen: v7x
topology: tpu7x:2x2x1
jax: 0.10.0
libtpu: 0.0.40
codegen_flags: <defaults>
</compile_context>

<pallas_src>
import math

import jax
import jax.numpy as jnp
from jax.experimental import pallas as pl
from jax.experimental.pallas import tpu as pltpu


def _build_pe(size: int, max_len: int) -> jnp.ndarray:
    """Deterministic sinusoidal table, identical to the PyTorch __init__ (float32)."""
    assert size % 2 == 0, "PositionalEncoding requires an even embedding size"
    position = jnp.arange(0, max_len, dtype=jnp.float32)[:, None]           # (max_len, 1)
    div_term = jnp.exp(
        jnp.arange(0, size, 2, dtype=jnp.float32) * -(math.log(10000.0) / size)
    )                                                                        # (size//2,)
    angles = position * div_term                                             # (max_len, size//2)
    # interleave: pe[:, 0::2] = sin, pe[:, 1::2] = cos
    pe = jnp.stack([jnp.sin(angles), jnp.cos(angles)], axis=-1).reshape(max_len, size)
    return pe[None, :, :]                                                    # (1, max_len, size)


def _add_pe_kernel(emb_ref, pe_ref, out_ref):
    # emb_ref / out_ref: (TM, TL) lane-dense tiles; pe_ref: (1, TL) row broadcast over
    # sublanes on the VPU.  Add in the promoted output dtype (PyTorch f32-buffer promotion).
    out_ref[...] = (emb_ref[...].astype(out_ref.dtype)
                    + pe_ref[...].astype(out_ref.dtype))


def _per_buffer_tile_bytes() -> int:
    """Generation-aware per-buffer tile target."""
    try:
        kind = jax.devices()[0].device_kind.lower()
    except Exception:
        kind = ""
    if ("v5e" in kind) or ("v5 lite" in kind) or ("v5lite" in kind):
        # v5e: ~0.8 TB/s HBM — 2 MiB tiles already sit on the roofline and the total
        # double-buffered footprint stays under the 16 MiB scoped-VMEM default.
        return 2 << 20
    # v6e / v7x: faster HBM makes per-step pipeline overhead proportionally larger, so
    # prefer ~4 MiB tiles (total ~16–26 MiB double-buffered; explicit vmem_limit below).
    return 4 << 20


def _choose_tiles(rows: int, lanes: int, itemsize: int, tile_bytes: int):
    """Pick (tm, tl) with tm sublane-aligned (mult of 8 or == rows) and tl lane-aligned
    (mult of 128 or == lanes), each buffer capped at ~tile_bytes.  Never inflates the
    tile past the budget (the old max(8, ...) bug)."""
    full_rows = max(1, tile_bytes // (lanes * itemsize))
    if rows <= full_rows:
        return rows, lanes                    # whole array in one tile (full dims: legal)
    if full_rows >= 8:
        return min(rows, (full_rows // 8) * 8), lanes
    # A single full row is wider than tile_bytes/8: keep tm = 8 sublanes and shrink the
    # lane tile instead so 8*tl*itemsize <= tile_bytes.
    tl = max(128, (tile_bytes // (8 * itemsize) // 128) * 128)
    return min(8, rows), tl


def _fold_factor(a0: int, L: int) -> int:
    """When a row (a1*d) is lane-skinny (< 128), fold `rep` consecutive a0 rows into the
    lane axis so stores are full-width unmasked vst instead of masked vst.msk."""
    if L >= 128 or a0 <= 1:
        return 1
    fallback = a0
    for rep in range(1, a0 + 1):
        if a0 % rep:
            continue
        if (rep * L) % 128 == 0:
            return rep                        # smallest divisor giving lane-aligned width
        if fallback == a0 and rep * L >= 512:
            fallback = rep                    # otherwise: at least a few hundred lanes
    return fallback


def positional_encoding_forward(emb: jnp.ndarray, pe: jnp.ndarray) -> jnp.ndarray:
    """emb: (A0, A1, D);  pe: (1, max_len, D) float32.  Returns emb + pe[:, :A1]."""
    a0, a1, d = emb.shape
    assert pe.shape[0] == 1 and pe.shape[2] == d, "pe shape mismatch"
    assert a1 <= pe.shape[1], f"sequence axis {a1} exceeds max_len {pe.shape[1]}"

    out_dtype = jnp.result_type(emb.dtype, pe.dtype)   # PyTorch promotes against f32 pe
    L = a1 * d
    pe_row = pe[:, :a1, :].reshape(1, L)               # tiny (<= max_len*d) slice

    # Lane-skinny handling: fold rows into the lane axis so the kernel's last dim is
    # lane-dense; pe is tiled rep times (still tiny).  rep == 1 for normal shapes.
    rep = _fold_factor(a0, L)
    rows, lanes = a0 // rep, rep * L
    emb2d = emb.reshape(rows, lanes)                   # free view
    if rep > 1:
        pe_row = jnp.tile(pe_row, (1, rep))

    itemsize = max(jnp.dtype(emb.dtype).itemsize,
                   jnp.dtype(pe.dtype).itemsize,
                   jnp.dtype(out_dtype).itemsize)
    tm, tl = _choose_tiles(rows, lanes, itemsize, _per_buffer_tile_bytes())

    # Total double-buffered VMEM: emb + out tiles, plus pe's (1, tl) row buffer.
    vmem_est = 2 * (tm * tl * (jnp.dtype(emb.dtype).itemsize
                               + jnp.dtype(out_dtype).itemsize)
                    + tl * jnp.dtype(pe.dtype).itemsize)
    vmem_limit = int(min(32 << 20, max(vmem_est + (2 << 20), 4 << 20)))

    # Grid: (lane tiles, row tiles).  Row axis innermost so pe's block index (0, j) is
    # constant across consecutive steps -> fetched once per lane tile.  Both axes are
    # "parallel" so Mosaic may shard them across the 2 TCs on v7x (megacore).
    grid = (pl.cdiv(lanes, tl), pl.cdiv(rows, tm))

    bytes_accessed = (emb2d.size * jnp.dtype(emb.dtype).itemsize
                      + emb2d.size * jnp.dtype(out_dtype).itemsize
                      + pe_row.size * jnp.dtype(pe.dtype).itemsize)

    out2d = pl.pallas_call(
        _add_pe_kernel,
        out_shape=jax.ShapeDtypeStruct((rows, lanes), out_dtype),
        grid_spec=pltpu.PrefetchScalarGridSpec(
            num_scalar_prefetch=0,
            grid=grid,
            in_specs=[
                pl.BlockSpec((tm, tl), lambda j, i: (i, j)),   # emb tile
                pl.BlockSpec((1, tl), lambda j, i: (0, j)),    # pe row, invariant in i
            ],
            out_specs=pl.BlockSpec((tm, tl), lambda j, i: (i, j)),
        ),
        compiler_params=pltpu.CompilerParams(
            dimension_semantics=("parallel", "parallel"),
            vmem_limit_bytes=vmem_limit,
        ),
        cost_estimate=pl.CostEstimate(
            flops=emb2d.size, transcendentals=0, bytes_accessed=bytes_accessed),
    )(emb2d, pe_row)

    return out2d.reshape(a0, a1, d)


if __name__ == "__main__":
    # Module config (deterministic): dim=32, max_len=64
    dim = 32
    max_len = 64

    pe = _build_pe(dim, max_len)

    # Input in the forward's convention: (axis0, axis1, dim); pe applied along axis 1.
    key = jax.random.PRNGKey(0)
    emb = jax.random.normal(key, (16, 8, dim), dtype=jnp.float32)

    out = jax.block_until_ready(positional_encoding_forward(emb, pe))

    # Reference check in plain JAX (same math and type promotion as the PyTorch forward)
    ref = emb + pe[:, : emb.shape[1]]
    assert out.shape == emb.shape
    assert out.dtype == ref.dtype
    assert jnp.allclose(out, ref, atol=1e-6), "mismatch vs reference"

    print("KERNEL_OK")
</pallas_src>

<mosaic_0001>
module attributes {stable_mosaic.version = 11 : i64} {
  func.func @_add_pe_kernel(%arg0: i32, %arg1: i32, %arg2: memref<16x256xf32, #tpu.memory_space<vmem>>, %arg3: memref<1x256xf32, #tpu.memory_space<vmem>>, %arg4: memref<16x256xf32, #tpu.memory_space<vmem>>) attributes {dimension_semantics = [#tpu.dimension_semantics<parallel>, #tpu.dimension_semantics<parallel>], iteration_bounds = array<i64: 1, 1>, scalar_prefetch = 0 : i64, scratch_operands = 0 : i64, tpu.core_type = #tpu.core_type<tc>, window_params = [{transform_indices = @transform_0, window_bounds = array<i64: 16, 256>}, {transform_indices = @transform_1, window_bounds = array<i64: 1, 256>}, {transform_indices = @transform_2, window_bounds = array<i64: 16, 256>}]} {
    %c0 = arith.constant 0 : index
    %c0_0 = arith.constant 0 : index
    %0 = vector.load %arg2[%c0, %c0_0] : memref<16x256xf32, #tpu.memory_space<vmem>>, vector<16x256xf32>
    %c0_1 = arith.constant 0 : index
    %c0_2 = arith.constant 0 : index
    %1 = vector.load %arg3[%c0_1, %c0_2] : memref<1x256xf32, #tpu.memory_space<vmem>>, vector<1x256xf32>
    %2 = vector.broadcast %1 : vector<1x256xf32> to vector<16x256xf32>
    %3 = arith.addf %0, %2 : vector<16x256xf32>
    %c0_3 = arith.constant 0 : index
    %c0_4 = arith.constant 0 : index
    %4 = vector.load %arg4[%c0_3, %c0_4] : memref<16x256xf32, #tpu.memory_space<vmem>>, vector<16x256xf32>
    tpu.vector_store %arg4[%c0_3, %c0_4], %3 {strides = array<i32>} : memref<16x256xf32, #tpu.memory_space<vmem>>, vector<16x256xf32>,
    return
  }
  func.func @transform_0(%arg0: i32, %arg1: i32) -> (i32, i32) {
    %c0_i32 = arith.constant 0 : i32
    return %arg1, %arg0 : i32, i32
  }
  func.func @transform_1(%arg0: i32, %arg1: i32) -> (i32, i32) {
    %c0_i32 = arith.constant 0 : i32
    %c0_i32_0 = arith.constant 0 : i32
    return %c0_i32, %arg0 : i32, i32
  }
  func.func @transform_2(%arg0: i32, %arg1: i32) -> (i32, i32) {
    %c0_i32 = arith.constant 0 : i32
    return %arg1, %arg0 : i32, i32
  }
}

</mosaic_0001>

<llo_original>
// kernel: tpu_custom_call.1
$region0: #{tpu_custom_call.1}
  #allocation0 [shape = 'u32[]', space=smem, size = 0x4, offset = 0x4, fixed_abs, tag = 'smem constant byte address 0x4 - core index']
  #allocation1 [shape = 'u32[144,128]{1,0:T(1,128)}', space=vmem, size = 0x12000, scoped, tag = 'internal scratch']
  %s0 = inlined_call_operand.hbm [shape: f32[16,256], index: 0, kind: input, shape index: {}]
  %s1 = inlined_call_operand.vmem [shape: f32[1,256], index: 1, kind: input, shape index: {}]
  %s2 = inlined_call_operand.hbm [shape: f32[16,256], index: 2, kind: output, shape index: {}]
  %s3 = sld [smem:[#allocation0]]
  $region22: #{tpu_custom_call.1} parent=0
    _
  %s5 = ssub.s32 1, %s3
  %s6 = scalar_select 0, %s5, %s3
  $region1: #{tpu_custom_call.1} parent=0
    #allocation2 [shape = 'u8[16384]{0}', space=vmem, size = 0x4000, scoped, tag = 'input window, operand 0, single buffered']
    #allocation3 [shape = 's32[1]{0}', space=sflag, size = 0x4, scoped, tag = 'scoped memory for tpu_custom_call.1']
    #allocation4 [shape = 's32[1]{0}', space=sflag, size = 0x4, scoped, tag = 'scoped memory for tpu_custom_call.1']
    #allocation5 [shape = 'u8[16384]{0}', space=vmem, size = 0x4000, scoped, tag = 'output window, operand 0, single buffered']
    %7 = vsyncpa [#allocation3], 0
    %8 = vsyncpa [#allocation4], 0
    // Predicated region
    $region2: #{tpu_custom_call.1} parent=1 // pred_check
      _
    $region3: #{tpu_custom_call.1} parent=1 // pred_check_branch
      %10 = sbr.rel (0) target = $region5
    $region4: #{tpu_custom_call.1} parent=1 // pred_region
      %s12 = ssub.s32 512, 512
      %13 = vsyncadd [#allocation3], %s12
      %s14 = sshll.u32 [#allocation2], 4
      %s15 = int_to_ptr.vmem [resolvable:$true] %s14
      %20 = dma.hbm_to_vmem [thread:$0]  %s0, 512, %s15, [#allocation3], 256, 256, 16
    $region5: #{tpu_custom_call.1} parent=1 // pred_fallthru
      _
    // Predicated region
    $region6: #{tpu_custom_call.1} parent=1 // pred_check
      _
    $region7: #{tpu_custom_call.1} parent=1 // pred_check_branch
      %22 = sbr.rel (0) target = $region9
    $region8: #{tpu_custom_call.1} parent=1 // pred_region
      _
    $region9: #{tpu_custom_call.1} parent=1 // pred_fallthru
      _
    // Predicated region
    $region10: #{tpu_custom_call.1} parent=1 // pred_check
      _
    $region11: #{tpu_custom_call.1} parent=1 // pred_check_branch
      %24 = sbr.rel (0) target = $region13
    $region12: #{tpu_custom_call.1} parent=1 // pred_region
      %25 = dma.done [#allocation3], 512
    $region13: #{tpu_custom_call.1} parent=1 // pred_fallthru
      _
    %v26 = vld [vmem:[#allocation2] sm:$0xff]
    %v27 = vld [vmem:[#allocation2 + $0x8] sm:$0xff]
    %v28 = vld [vmem:[#allocation2 + $0x10] sm:$0xff]
    %v29 = vld [vmem:[#allocation2 + $0x18] sm:$0xff]
    %v30 = vld [vmem:[%s1] sm:$0x3]
    %v32 = vlaneseq
    %v33 = vshrl.u32 %v32, 7
    %v34 = vsub.s32 0, %v33
    %v35 = vrot.slane %v30, %v34
    %v36 = vlaneseq
    %v37 = vshrl.u32 %v36, 7
    %v38 = vsub.s32 1, %v37
    %v39 = vrot.slane %v30, %v38
    %v42 = vadd.f32 %v26, %v35
    %v43 = vadd.f32 %v27, %v39
    %v44 = vadd.f32 %v28, %v35
    %v45 = vadd.f32 %v29, %v39
    %46 = vst [vmem:[#allocation5] sm:$0xff] %v42
    %47 = vst [vmem:[#allocation5 + $0x8] sm:$0xff] %v43
    %48 = vst [vmem:[#allocation5 + $0x10] sm:$0xff] %v44
    %49 = vst [vmem:[#allocation5 + $0x18] sm:$0xff] %v45
    // Predicated region
    $region14: #{tpu_custom_call.1} parent=1 // pred_check
      _
    $region15: #{tpu_custom_call.1} parent=1 // pred_check_branch
      %51 = sbr.rel (0) target = $region17
    $region16: #{tpu_custom_call.1} parent=1 // pred_region
      %s53 = ssub.s32 512, 512
      %54 = vsyncadd [#allocation4], %s53
      %s55 = sshll.u32 [#allocation5], 4
      %s56 = int_to_ptr.vmem [resolvable:$true] %s55
      %61 = dma.vmem_to_hbm [thread:$0]  %s56, 512, %s2, [#allocation4], 256, 256, 16
    $region17: #{tpu_custom_call.1} parent=1 // pred_fallthru
      _
    // Predicated region
    $region18: #{tpu_custom_call.1} parent=1 // pred_check
      _
    $region19: #{tpu_custom_call.1} parent=1 // pred_check_branch
      %63 = sbr.rel (0) target = $region21
    $region20: #{tpu_custom_call.1} parent=1 // pred_region
      %64 = dma.done [#allocation4], 512
    $region21: #{tpu_custom_call.1} parent=1 // pred_fallthru
      _
    %65 = vsyncpa [#allocation3], 1
    %66 = vsyncpa [#allocation4], 1

</llo_original>
